<compile_context>
chip_gen: v5e
topology: v5e:2x2
jax: 0.10.0
libtpu: 0.0.40
codegen_flags: <defaults>
</compile_context>

<pallas_src>
import jax
import jax.numpy as jnp
from jax.experimental import pallas as pl
from jax.experimental.pallas import tpu as pltpu


def _round_up(x, m):
    return (x + m - 1) // m * m


def _class_pad_multiple(num_classes):
    """Lane-dense class padding: 128 on v5e-and-older (128-wide MXU),
    256 on v6e/v7x when C > 128 (256-wide MXU)."""
    if num_classes <= 128:
        return 128
    try:
        kind = jax.devices()[0].device_kind.lower()
    except Exception:  # pragma: no cover
        kind = ""
    old_gen = any(t in kind for t in ("v2", "v3", "v4", "v5"))
    return 128 if old_gen else 256


def _pick_tile_k(D, max_tk=2048):
    """Largest multiple of 128 that divides D (<= max_tk); D if none exists."""
    best = D
    k = 128
    while k <= min(D, max_tk):
        if D % k == 0:
            best = k
        k += 128
    # TODO(synk): for huge D with no 128-multiple divisor, pad D (weight at
    # prep time, activations per call) instead of keeping all of K resident.
    return best


# ---------------------------------------------------------------------------
# Kernels
# ---------------------------------------------------------------------------

def _linear_kernel(x_ref, w_ref, b_ref, o_ref):
    # x: (TM, D), w: (D, Cp), b: (1, Cp) -> o: (TM, Cp). f32 MXU accumulation.
    acc = jnp.dot(x_ref[...], w_ref[...], preferred_element_type=jnp.float32)
    o_ref[...] = (acc + b_ref[...]).astype(o_ref.dtype)


def _linear_kernel_kblocked(x_ref, w_ref, b_ref, o_ref, acc_ref):
    # Reduction over D in K blocks; f32 accumulator scratch, bias on last step.
    k = pl.program_id(1)

    @pl.when(k == 0)
    def _():
        acc_ref[...] = jnp.zeros_like(acc_ref)

    acc_ref[...] += jnp.dot(x_ref[...], w_ref[...],
                            preferred_element_type=jnp.float32)

    @pl.when(k == pl.num_programs(1) - 1)
    def _():
        o_ref[...] = (acc_ref[...] + b_ref[...]).astype(o_ref.dtype)


# ---------------------------------------------------------------------------
# Wrappers
# ---------------------------------------------------------------------------

def prepare_linear_params(w, b, *, compute_dtype=jnp.bfloat16, lane_multiple=None):
    """One-time weight prep: transpose (C, D) -> (D, Cp) with zero class pad,
    cast to the compute dtype, and lift the bias to a (1, Cp) f32 row.

    Do this ONCE per set of weights and reuse across calls; it is a full HBM
    read+write of the weight and must not sit on the per-step path."""
    C, D = w.shape
    if lane_multiple is None:
        lane_multiple = _class_pad_multiple(C)
    Cp = _round_up(C, lane_multiple)
    w_t = jnp.zeros((D, Cp), compute_dtype).at[:, :C].set(w.T.astype(compute_dtype))
    b2 = jnp.zeros((1, Cp), jnp.float32).at[0, :C].set(b.astype(jnp.float32))
    return w_t, b2, C


def linear_classifier_apply(x, w_t, b2, num_classes, *, tile_m=512, tile_k=None):
    """y = x @ W.T + b using prepared (transposed / class-padded) parameters."""
    B, D = x.shape
    Dw, Cp = w_t.shape
    assert D == Dw, "input_dim mismatch between x and prepared weight"
    compute_dtype = w_t.dtype
    csize = jnp.dtype(compute_dtype).itemsize

    # In a full model the activations should already arrive in compute_dtype
    # (bf16); this cast only fires for f32 callers and ideally fuses upstream.
    x_c = x if x.dtype == compute_dtype else x.astype(compute_dtype)

    # ---- batch tiling (no padded x copy: ragged last tile is boundary-masked).
    TM = min(tile_m, _round_up(B, 8))
    if TM > 256 and pl.cdiv(B, TM) < 4:
        TM = 256  # guarantee >= 2 batch tiles so both v7x TensorCores get work
    num_m = pl.cdiv(B, TM)

    # ---- reduction (D) tiling: only when the resident weight would blow VMEM
    # (v7x has 64 MiB total). TK must divide D so no OOB garbage is accumulated.
    if tile_k is None:
        tile_k = D if D * Cp * csize <= (16 << 20) else _pick_tile_k(D)
    TK = tile_k
    k_blocked = TK != D
    if k_blocked:
        assert D % TK == 0, "tile_k must divide input_dim"
    num_k = D // TK if k_blocked else 1

    # ---- explicit VMEM budget (conservative: double-buffered x / w / out).
    need = (2 * TM * TK * csize            # x tiles
            + 2 * TK * Cp * csize          # weight block(s)
            + Cp * 4                       # bias
            + 2 * TM * Cp * 4              # output tiles (f32)
            + (TM * Cp * 4 if k_blocked else 0))  # accumulator scratch
    vmem_limit = int(min(max(need + (4 << 20), 16 << 20), 64 << 20))

    cost = pl.CostEstimate(
        flops=2 * B * D * num_classes,
        transcendentals=0,
        bytes_accessed=B * D * csize + D * Cp * csize + Cp * 4 + B * Cp * 4,
    )

    def run(use_buffered):
        def spec(shape, index_map, single_buffer=False):
            if single_buffer and use_buffered:
                # Constant index_map -> fetched once and resident;
                # double-buffering it would just waste VMEM.
                return pl.BlockSpec(shape, index_map,
                                    pipeline_mode=pl.Buffered(1))
            return pl.BlockSpec(shape, index_map)

        if not k_blocked:
            grid = (num_m,)
            in_specs = [
                spec((TM, D), lambda i: (i, 0)),                     # x marches
                spec((D, Cp), lambda i: (0, 0), single_buffer=True),  # weight
                spec((1, Cp), lambda i: (0, 0), single_buffer=True),  # bias
            ]
            out_specs = pl.BlockSpec((TM, Cp), lambda i: (i, 0))
            scratch = ()
            kernel = _linear_kernel
            dims = ("parallel",)
        else:
            grid = (num_m, num_k)
            in_specs = [
                spec((TM, TK), lambda i, k: (i, k)),
                spec((TK, Cp), lambda i, k: (k, 0)),
                spec((1, Cp), lambda i, k: (0, 0), single_buffer=True),
            ]
            out_specs = pl.BlockSpec((TM, Cp), lambda i, k: (i, 0))
            scratch = (pltpu.VMEM((TM, Cp), jnp.float32),)
            kernel = _linear_kernel_kblocked
            dims = ("parallel", "arbitrary")

        return pl.pallas_call(
            kernel,
            out_shape=jax.ShapeDtypeStruct((B, Cp), jnp.float32),
            grid_spec=pltpu.PrefetchScalarGridSpec(
                num_scalar_prefetch=0,
                grid=grid,
                in_specs=in_specs,
                out_specs=out_specs,
                scratch_shapes=scratch,
            ),
            compiler_params=pltpu.CompilerParams(
                dimension_semantics=dims,
                vmem_limit_bytes=vmem_limit,
            ),
            cost_estimate=cost,
        )(x_c, w_t, b2)

    try:
        out = run(True)
    except Exception:  # pragma: no cover - fallback if pipeline_mode/Buffered unsupported
        out = run(False)

    # Batch dim is never padded (out_shape is (B, Cp)); slice classes only if padded.
    return out if Cp == num_classes else out[:, :num_classes]


def linear_classifier(x, w, b, *, compute_dtype=jnp.bfloat16, tile_m=512,
                      tile_k=None):
    """Convenience one-shot wrapper. For repeated calls, run
    `prepare_linear_params` once and reuse it with `linear_classifier_apply`
    so the weight transpose/pad is not paid per call."""
    w_t, b2, C = prepare_linear_params(w, b, compute_dtype=compute_dtype)
    return linear_classifier_apply(x, w_t, b2, C, tile_m=tile_m, tile_k=tile_k)


if __name__ == "__main__":
    key = jax.random.PRNGKey(0)

    def make_inputs(batch, input_dim, classes, k):
        kx, kw, kb = jax.random.split(k, 3)
        # Deterministic init mimicking nn.Linear's uniform(-1/sqrt(D), 1/sqrt(D)).
        bound = 1.0 / (input_dim ** 0.5)
        w = jax.random.uniform(kw, (classes, input_dim), jnp.float32, -bound, bound)
        b = jax.random.uniform(kb, (classes,), jnp.float32, -bound, bound)
        x = jax.random.normal(kx, (batch, input_dim), jnp.float32)
        return x, w, b

    k1, k2, k3 = jax.random.split(key, 3)

    # 1) Exact-parity f32 path (matches nn.Linear numerics), simple kernel.
    x, w, b = make_inputs(8, 32, 10, k1)
    out = jax.block_until_ready(
        linear_classifier(x, w, b, compute_dtype=jnp.float32))
    ref = x @ w.T + b
    assert out.shape == (8, 10)
    assert jnp.allclose(out, ref, atol=1e-5, rtol=1e-5)

    # 2) Default bf16-input / f32-accumulate path with a ragged batch (B % 8 != 0).
    x, w, b = make_inputs(10, 32, 10, k2)
    out = jax.block_until_ready(linear_classifier(x, w, b))
    ref = x @ w.T + b
    assert out.shape == (10, 10)
    assert jnp.allclose(out, ref, atol=5e-2, rtol=5e-2)

    # 3) K-blocked reduction path (forced small tile_k) exercising the
    #    accumulator / pl.when init-finalize logic.
    x, w, b = make_inputs(16, 512, 10, k3)
    out = jax.block_until_ready(linear_classifier(x, w, b, tile_k=128))
    ref = x @ w.T + b
    assert out.shape == (16, 10)
    assert jnp.allclose(out, ref, atol=5e-2, rtol=5e-2)

    print("KERNEL_OK")
</pallas_src>

<mosaic_0001>
module attributes {stable_mosaic.version = 11 : i64} {
  func.func @_linear_kernel(%arg0: i32, %arg1: memref<8x32xf32, #tpu.memory_space<vmem>>, %arg2: memref<32x128xf32, #tpu.memory_space<vmem>>, %arg3: memref<1x128xf32, #tpu.memory_space<vmem>>, %arg4: memref<8x128xf32, #tpu.memory_space<vmem>>) attributes {dimension_semantics = [#tpu.dimension_semantics<parallel>], iteration_bounds = array<i64: 1>, scalar_prefetch = 0 : i64, scratch_operands = 0 : i64, tpu.core_type = #tpu.core_type<tc>, window_params = [{transform_indices = @transform_0, window_bounds = array<i64: 8, 32>}, {pipeline_mode = #tpu.pipeline_mode<synchronous>, transform_indices = @transform_1, window_bounds = array<i64: 32, 128>}, {pipeline_mode = #tpu.pipeline_mode<synchronous>, transform_indices = @transform_2, window_bounds = array<i64: 1, 128>}, {transform_indices = @transform_3, window_bounds = array<i64: 8, 128>}]} {
    %c0 = arith.constant 0 : index
    %c0_0 = arith.constant 0 : index
    %0 = vector.load %arg1[%c0, %c0_0] : memref<8x32xf32, #tpu.memory_space<vmem>>, vector<8x32xf32>
    %c0_1 = arith.constant 0 : index
    %c0_2 = arith.constant 0 : index
    %1 = vector.load %arg2[%c0_1, %c0_2] : memref<32x128xf32, #tpu.memory_space<vmem>>, vector<32x128xf32>
    %cst = arith.constant dense<0.000000e+00> : vector<8x128xf32>
    %2 = tpu.matmul %0, %1, %cst {dimension_numbers = #tpu.dot_dimension_numbers<[1], [0], [0], [1], [0, 0, 1, 1], [], []>} : vector<8x32xf32>, vector<32x128xf32>, vector<8x128xf32> -> vector<8x128xf32>
    %c0_3 = arith.constant 0 : index
    %c0_4 = arith.constant 0 : index
    %3 = vector.load %arg3[%c0_3, %c0_4] : memref<1x128xf32, #tpu.memory_space<vmem>>, vector<1x128xf32>
    %4 = vector.broadcast %3 : vector<1x128xf32> to vector<8x128xf32>
    %5 = arith.addf %2, %4 : vector<8x128xf32>
    %c0_5 = arith.constant 0 : index
    %c0_6 = arith.constant 0 : index
    %6 = vector.load %arg4[%c0_5, %c0_6] : memref<8x128xf32, #tpu.memory_space<vmem>>, vector<8x128xf32>
    tpu.vector_store %arg4[%c0_5, %c0_6], %5 {strides = array<i32>} : memref<8x128xf32, #tpu.memory_space<vmem>>, vector<8x128xf32>,
    return
  }
  func.func @transform_0(%arg0: i32) -> (i32, i32) {
    %c0_i32 = arith.constant 0 : i32
    %c0_i32_0 = arith.constant 0 : i32
    return %arg0, %c0_i32 : i32, i32
  }
  func.func @transform_1(%arg0: i32) -> (i32, i32) {
    %c0_i32 = arith.constant 0 : i32
    %c0_i32_0 = arith.constant 0 : i32
    %c0_i32_1 = arith.constant 0 : i32
    return %c0_i32, %c0_i32_0 : i32, i32
  }
  func.func @transform_2(%arg0: i32) -> (i32, i32) {
    %c0_i32 = arith.constant 0 : i32
    %c0_i32_0 = arith.constant 0 : i32
    %c0_i32_1 = arith.constant 0 : i32
    return %c0_i32, %c0_i32_0 : i32, i32
  }
  func.func @transform_3(%arg0: i32) -> (i32, i32) {
    %c0_i32 = arith.constant 0 : i32
    %c0_i32_0 = arith.constant 0 : i32
    return %arg0, %c0_i32 : i32, i32
  }
}

module attributes {stable_mosaic.version = 11 : i64} {
  func.func @_linear_kernel(%arg0: i32, %arg1: memref<8x32xf32, #tpu.memory_space<vmem>>, %arg2: memref<32x128xf32, #tpu.memory_space<vmem>>, %arg3: memref<1x128xf32, #tpu.memory_space<vmem>>, %arg4: memref<8x128xf32, #tpu.memory_space<vmem>>) attributes {dimension_semantics = [#tpu.dimension_semantics<parallel>], iteration_bounds = array<i64: 1>, scalar_prefetch = 0 : i64, scratch_operands = 0 : i64, tpu.core_type = #tpu.core_type<tc>, window_params = [{transform_indices = @transform_0, window_bounds = array<i64: 8, 32>}, {pipeline_mode = #tpu.pipeline_mode<synchronous>, transform_indices = @transform_1, window_bounds = array<i64: 32, 128>}, {pipeline_mode = #tpu.pipeline_mode<synchronous>, transform_indices = @transform_2, window_bounds = array<i64: 1, 128>}, {transform_indices = @transform_3, window_bounds = array<i64: 8, 128>}]} {
    %c0 = arith.constant 0 : index
    %c0_0 = arith.constant 0 : index
    %0 = vector.load %arg1[%c0, %c0_0] : memref<8x32xf32, #tpu.memory_space<vmem>>, vector<8x32xf32>
    %c0_1 = arith.constant 0 : index
    %c0_2 = arith.constant 0 : index
    %1 = vector.load %arg2[%c0_1, %c0_2] : memref<32x128xf32, #tpu.memory_space<vmem>>, vector<32x128xf32>
    %cst = arith.constant dense<0.000000e+00> : vector<8x128xf32>
    %2 = tpu.matmul %0, %1, %cst {dimension_numbers = #tpu.dot_dimension_numbers<[1], [0], [0], [1], [0, 0, 1, 1], [], []>} : vector<8x32xf32>, vector<32x128xf32>, vector<8x128xf32> -> vector<8x128xf32>
    %c0_3 = arith.constant 0 : index
    %c0_4 = arith.constant 0 : index
    %3 = vector.load %arg3[%c0_3, %c0_4] : memref<1x128xf32, #tpu.memory_space<vmem>>, vector<1x128xf32>
    %4 = vector.broadcast %3 : vector<1x128xf32> to vector<8x128xf32>
    %5 = arith.addf %2, %4 : vector<8x128xf32>
    %c0_5 = arith.constant 0 : index
    %c0_6 = arith.constant 0 : index
    %6 = vector.load %arg4[%c0_5, %c0_6] : memref<8x128xf32, #tpu.memory_space<vmem>>, vector<8x128xf32>
    tpu.vector_store %arg4[%c0_5, %c0_6], %5 {strides = array<i32>} : memref<8x128xf32, #tpu.memory_space<vmem>>, vector<8x128xf32>,
    return
  }
  func.func @transform_0(%arg0: i32) -> (i32, i32) {
    %c0_i32 = arith.constant 0 : i32
    %c0_i32_0 = arith.constant 0 : i32
    return %arg0, %c0_i32 : i32, i32
  }
  func.func @transform_1(%arg0: i32) -> (i32, i32) {
    %c0_i32 = arith.constant 0 : i32
    %c0_i32_0 = arith.constant 0 : i32
    %c0_i32_1 = arith.constant 0 : i32
    return %c0_i32, %c0_i32_0 : i32, i32
  }
  func.func @transform_2(%arg0: i32) -> (i32, i32) {
    %c0_i32 = arith.constant 0 : i32
    %c0_i32_0 = arith.constant 0 : i32
    %c0_i32_1 = arith.constant 0 : i32
    return %c0_i32, %c0_i32_0 : i32, i32
  }
  func.func @transform_3(%arg0: i32) -> (i32, i32) {
    %c0_i32 = arith.constant 0 : i32
    %c0_i32_0 = arith.constant 0 : i32
    return %arg0, %c0_i32 : i32, i32
  }
}

</mosaic_0001>

<llo_original>
// kernel: tpu_custom_call.1
$region0: #{tpu_custom_call.1}
  #allocation0 [shape = 'u32[]', space=smem, size = 0x4, offset = 0x4, fixed_abs, tag = 'smem constant byte address 0x4 - core index']
  #allocation1 [shape = 'u32[72,128]{1,0:T(1,128)}', space=vmem, size = 0x9000, scoped, tag = 'internal scratch']
  %s0 = inlined_call_operand.hbm [shape: f32[8,32], index: 0, kind: input, shape index: {}]
  %s1 = inlined_call_operand.hbm [shape: f32[32,128], index: 1, kind: input, shape index: {}]
  %s2 = inlined_call_operand.vmem [shape: f32[1,128], index: 2, kind: input, shape index: {}]
  %s3 = inlined_call_operand.hbm [shape: f32[8,128], index: 3, kind: output, shape index: {}]
  %s4 = sld [smem:[#allocation0]]
  $region30: #{tpu_custom_call.1} parent=0
    _
  %s6 = ssub.s32 1, %s4
  %s7 = scalar_select 0, %s6, %s4
  $region1: #{tpu_custom_call.1} parent=0
    #allocation2 [shape = 'u8[4096]{0}', space=vmem, size = 0x1000, scoped, tag = 'input window, operand 0, single buffered']
    #allocation3 [shape = 's32[1]{0}', space=sflag, size = 0x4, scoped, tag = 'scoped memory for tpu_custom_call.1']
    #allocation4 [shape = 's32[1]{0}', space=sflag, size = 0x4, scoped, tag = 'scoped memory for tpu_custom_call.1']
    #allocation5 [shape = 'u8[16384]{0}', space=vmem, size = 0x4000, scoped, tag = 'input window, operand 1, single buffered']
    #allocation6 [shape = 's32[1]{0}', space=sflag, size = 0x4, scoped, tag = 'scoped memory for tpu_custom_call.1']
    #allocation7 [shape = 'u8[4096]{0}', space=vmem, size = 0x1000, scoped, tag = 'output window, operand 0, single buffered']
    %8 = vsyncpa [#allocation3], 0
    %9 = vsyncpa [#allocation6], 0
    %10 = vsyncpa [#allocation4], 0
    // Predicated region
    $region2: #{tpu_custom_call.1} parent=1 // pred_check
      _
    $region3: #{tpu_custom_call.1} parent=1 // pred_check_branch
      %12 = sbr.rel (0) target = $region5
    $region4: #{tpu_custom_call.1} parent=1 // pred_region
      %14 = vsyncadd [#allocation3], 0
      %s16 = sshll.u32 %s0, 4
      %s17 = int_to_ptr.hbm [resolvable:$true] %s16
      %s18 = sshll.u32 [#allocation2], 4
      %s19 = int_to_ptr.vmem [resolvable:$true] %s18
      %21 = dma.hbm_to_vmem [thread:$0]  %s17, 128, %s19, [#allocation3]
    $region5: #{tpu_custom_call.1} parent=1 // pred_fallthru
      _
    // Predicated region
    $region6: #{tpu_custom_call.1} parent=1 // pred_check
      _
    $region7: #{tpu_custom_call.1} parent=1 // pred_check_branch
      %23 = sbr.rel (0) target = $region9
    $region8: #{tpu_custom_call.1} parent=1 // pred_region
      %25 = vsyncadd [#allocation6], 0
      %s26 = sshll.u32 %s1, 4
      %s27 = int_to_ptr.hbm [resolvable:$true] %s26
      %s28 = sshll.u32 [#allocation5], 4
      %s29 = int_to_ptr.vmem [resolvable:$true] %s28
      %34 = dma.hbm_to_vmem [thread:$0]  %s27, 512, %s29, [#allocation6], 128, 128, 8
    $region9: #{tpu_custom_call.1} parent=1 // pred_fallthru
      _
    // Predicated region
    $region10: #{tpu_custom_call.1} parent=1 // pred_check
      _
    $region11: #{tpu_custom_call.1} parent=1 // pred_check_branch
      %36 = sbr.rel (0) target = $region13
    $region12: #{tpu_custom_call.1} parent=1 // pred_region
      _
    $region13: #{tpu_custom_call.1} parent=1 // pred_fallthru
      _
    // Predicated region
    $region14: #{tpu_custom_call.1} parent=1 // pred_check
      _
    $region15: #{tpu_custom_call.1} parent=1 // pred_check_branch
      %38 = sbr.rel (0) target = $region17
    $region16: #{tpu_custom_call.1} parent=1 // pred_region
      %40 = dma.done [#allocation3], 128
    $region17: #{tpu_custom_call.1} parent=1 // pred_fallthru
      _
    // Predicated region
    $region18: #{tpu_custom_call.1} parent=1 // pred_check
      _
    $region19: #{tpu_custom_call.1} parent=1 // pred_check_branch
      %42 = sbr.rel (0) target = $region21
    $region20: #{tpu_custom_call.1} parent=1 // pred_region
      %44 = dma.done [#allocation6], 512
    $region21: #{tpu_custom_call.1} parent=1 // pred_fallthru
      _
    %v45 = vld [vmem:[#allocation2] sm:$0xff]
    %v46 = vld [vmem:[#allocation5] sm:$0xff]
    %v47 = vld [vmem:[#allocation5 + $0x8] sm:$0xff]
    %v48 = vld [vmem:[#allocation5 + $0x10] sm:$0xff]
    %v49 = vld [vmem:[#allocation5 + $0x18] sm:$0xff]
    %v50 = vld [vmem:[%s2] sm:$0x1]
    %v52 = vperm.slane %v50, 0
    %vm54 = vcmask 261120
    %v56 = vsel %vm54, %v45, 0
    %58 = vmatpush.msra.mxu0 0.0
    %59 = vmatpush.msra.mxu0 0.0
    %60 = vmatpush.msra.mxu0 0.0
    %61 = vmatpush.msra.mxu0 0.0
    %62 = vmatpush.msra.mxu0 0.0
    %63 = vmatpush.msra.mxu0 0.0
    %64 = vmatpush.msra.mxu0 0.0
    %65 = vmatpush.msra.mxu0 0.0
    %66 = vmatpush.msra.mxu0 0.0
    %67 = vmatpush.msra.mxu0 0.0
    %68 = vmatpush.msra.mxu0 0.0
    %69 = vmatpush.msra.mxu0 0.0
    %70 = vmatpush.msra.mxu0 %v49
    %71 = vmatpush.msra.mxu0 %v48
    %72 = vmatpush.msra.mxu0 %v47
    %73 = vmatpush.msra.mxu0 %v46
    %74 = vmatmul.f32.gmra.mxu0 %v56
    %v75 = vpop.f32.mrf.mxu0
    %v76 = vadd.f32 %v52, %v75
    %77 = vdwg.mxu0
    %78 = vst [vmem:[#allocation7] sm:$0xff] %v76
    // Predicated region
    $region22: #{tpu_custom_call.1} parent=1 // pred_check
      _
    $region23: #{tpu_custom_call.1} parent=1 // pred_check_branch
      %80 = sbr.rel (0) target = $region25
    $region24: #{tpu_custom_call.1} parent=1 // pred_region
      %82 = vsyncadd [#allocation4], 0
      %s84 = sshll.u32 [#allocation7], 4
      %s85 = int_to_ptr.vmem [resolvable:$true] %s84
      %s86 = sshll.u32 %s3, 4
      %s87 = int_to_ptr.hbm [resolvable:$true] %s86
      %89 = dma.vmem_to_hbm [thread:$0]  %s85, 128, %s87, [#allocation4]
    $region25: #{tpu_custom_call.1} parent=1 // pred_fallthru
      _
    // Predicated region
    $region26: #{tpu_custom_call.1} parent=1 // pred_check
      _
    $region27: #{tpu_custom_call.1} parent=1 // pred_check_branch
      %91 = sbr.rel (0) target = $region29
    $region28: #{tpu_custom_call.1} parent=1 // pred_region
      %93 = dma.done [#allocation4], 128
    $region29: #{tpu_custom_call.1} parent=1 // pred_fallthru
      _
    %94 = vsyncpa [#allocation3], 1
    %95 = vsyncpa [#allocation6], 1
    %96 = vsyncpa [#allocation4], 1

// kernel: tpu_custom_call.1
$region0: #{tpu_custom_call.1}
  #allocation0 [shape = 'u32[]', space=smem, size = 0x4, offset = 0x4, fixed_abs, tag = 'smem constant byte address 0x4 - core index']
  #allocation1 [shape = 'u32[72,128]{1,0:T(1,128)}', space=vmem, size = 0x9000, scoped, tag = 'internal scratch']
  %s0 = inlined_call_operand.hbm [shape: f32[8,32], index: 0, kind: input, shape index: {}]
  %s1 = inlined_call_operand.hbm [shape: f32[32,128], index: 1, kind: input, shape index: {}]
  %s2 = inlined_call_operand.vmem [shape: f32[1,128], index: 2, kind: input, shape index: {}]
  %s3 = inlined_call_operand.hbm [shape: f32[8,128], index: 3, kind: output, shape index: {}]
  %s4 = sld [smem:[#allocation0]]
  $region30: #{tpu_custom_call.1} parent=0
    _
  %s6 = ssub.s32 1, %s4
  %s7 = scalar_select 0, %s6, %s4
  $region1: #{tpu_custom_call.1} parent=0
    #allocation2 [shape = 'u8[4096]{0}', space=vmem, size = 0x1000, scoped, tag = 'input window, operand 0, single buffered']
    #allocation3 [shape = 's32[1]{0}', space=sflag, size = 0x4, scoped, tag = 'scoped memory for tpu_custom_call.1']
    #allocation4 [shape = 's32[1]{0}', space=sflag, size = 0x4, scoped, tag = 'scoped memory for tpu_custom_call.1']
    #allocation5 [shape = 'u8[16384]{0}', space=vmem, size = 0x4000, scoped, tag = 'input window, operand 1, single buffered']
    #allocation6 [shape = 's32[1]{0}', space=sflag, size = 0x4, scoped, tag = 'scoped memory for tpu_custom_call.1']
    #allocation7 [shape = 'u8[4096]{0}', space=vmem, size = 0x1000, scoped, tag = 'output window, operand 0, single buffered']
    %8 = vsyncpa [#allocation3], 0
    %9 = vsyncpa [#allocation6], 0
    %10 = vsyncpa [#allocation4], 0
    // Predicated region
    $region2: #{tpu_custom_call.1} parent=1 // pred_check
      _
    $region3: #{tpu_custom_call.1} parent=1 // pred_check_branch
      %12 = sbr.rel (0) target = $region5
    $region4: #{tpu_custom_call.1} parent=1 // pred_region
      %14 = vsyncadd [#allocation3], 0
      %s16 = sshll.u32 %s0, 4
      %s17 = int_to_ptr.hbm [resolvable:$true] %s16
      %s18 = sshll.u32 [#allocation2], 4
      %s19 = int_to_ptr.vmem [resolvable:$true] %s18
      %21 = dma.hbm_to_vmem [thread:$0]  %s17, 128, %s19, [#allocation3]
    $region5: #{tpu_custom_call.1} parent=1 // pred_fallthru
      _
    // Predicated region
    $region6: #{tpu_custom_call.1} parent=1 // pred_check
      _
    $region7: #{tpu_custom_call.1} parent=1 // pred_check_branch
      %23 = sbr.rel (0) target = $region9
    $region8: #{tpu_custom_call.1} parent=1 // pred_region
      %25 = vsyncadd [#allocation6], 0
      %s26 = sshll.u32 %s1, 4
      %s27 = int_to_ptr.hbm [resolvable:$true] %s26
      %s28 = sshll.u32 [#allocation5], 4
      %s29 = int_to_ptr.vmem [resolvable:$true] %s28
      %34 = dma.hbm_to_vmem [thread:$0]  %s27, 512, %s29, [#allocation6], 128, 128, 8
    $region9: #{tpu_custom_call.1} parent=1 // pred_fallthru
      _
    // Predicated region
    $region10: #{tpu_custom_call.1} parent=1 // pred_check
      _
    $region11: #{tpu_custom_call.1} parent=1 // pred_check_branch
      %36 = sbr.rel (0) target = $region13
    $region12: #{tpu_custom_call.1} parent=1 // pred_region
      _
    $region13: #{tpu_custom_call.1} parent=1 // pred_fallthru
      _
    // Predicated region
    $region14: #{tpu_custom_call.1} parent=1 // pred_check
      _
    $region15: #{tpu_custom_call.1} parent=1 // pred_check_branch
      %38 = sbr.rel (0) target = $region17
    $region16: #{tpu_custom_call.1} parent=1 // pred_region
      %40 = dma.done [#allocation3], 128
    $region17: #{tpu_custom_call.1} parent=1 // pred_fallthru
      _
    // Predicated region
    $region18: #{tpu_custom_call.1} parent=1 // pred_check
      _
    $region19: #{tpu_custom_call.1} parent=1 // pred_check_branch
      %42 = sbr.rel (0) target = $region21
    $region20: #{tpu_custom_call.1} parent=1 // pred_region
      %44 = dma.done [#allocation6], 512
    $region21: #{tpu_custom_call.1} parent=1 // pred_fallthru
      _
    %v45 = vld [vmem:[#allocation2] sm:$0xff]
    %v46 = vld [vmem:[#allocation5] sm:$0xff]
    %v47 = vld [vmem:[#allocation5 + $0x8] sm:$0xff]
    %v48 = vld [vmem:[#allocation5 + $0x10] sm:$0xff]
    %v49 = vld [vmem:[#allocation5 + $0x18] sm:$0xff]
    %v50 = vld [vmem:[%s2] sm:$0x1]
    %v52 = vperm.slane %v50, 0
    %vm54 = vcmask 261120
    %v56 = vsel %vm54, %v45, 0
    %58 = vmatpush.msra.mxu0 0.0
    %59 = vmatpush.msra.mxu0 0.0
    %60 = vmatpush.msra.mxu0 0.0
    %61 = vmatpush.msra.mxu0 0.0
    %62 = vmatpush.msra.mxu0 0.0
    %63 = vmatpush.msra.mxu0 0.0
    %64 = vmatpush.msra.mxu0 0.0
    %65 = vmatpush.msra.mxu0 0.0
    %66 = vmatpush.msra.mxu0 0.0
    %67 = vmatpush.msra.mxu0 0.0
    %68 = vmatpush.msra.mxu0 0.0
    %69 = vmatpush.msra.mxu0 0.0
    %70 = vmatpush.msra.mxu0 %v49
    %71 = vmatpush.msra.mxu0 %v48
    %72 = vmatpush.msra.mxu0 %v47
    %73 = vmatpush.msra.mxu0 %v46
    %74 = vmatmul.f32.gmra.mxu0 %v56
    %v75 = vpop.f32.mrf.mxu0
    %v76 = vadd.f32 %v52, %v75
    %77 = vdwg.mxu0
    %78 = vst [vmem:[#allocation7] sm:$0xff] %v76
    // Predicated region
    $region22: #{tpu_custom_call.1} parent=1 // pred_check
      _
    $region23: #{tpu_custom_call.1} parent=1 // pred_check_branch
      %80 = sbr.rel (0) target = $region25
    $region24: #{tpu_custom_call.1} parent=1 // pred_region
      %82 = vsyncadd [#allocation4], 0
      %s84 = sshll.u32 [#allocation7], 4
      %s85 = int_to_ptr.vmem [resolvable:$true] %s84
      %s86 = sshll.u32 %s3, 4
      %s87 = int_to_ptr.hbm [resolvable:$true] %s86
      %89 = dma.vmem_to_hbm [thread:$0]  %s85, 128, %s87, [#allocation4]
    $region25: #{tpu_custom_call.1} parent=1 // pred_fallthru
      _
    // Predicated region
    $region26: #{tpu_custom_call.1} parent=1 // pred_check
      _
    $region27: #{tpu_custom_call.1} parent=1 // pred_check_branch
      %91 = sbr.rel (0) target = $region29
    $region28: #{tpu_custom_call.1} parent=1 // pred_region
      %93 = dma.done [#allocation4], 128
    $region29: #{tpu_custom_call.1} parent=1 // pred_fallthru
      _
    %94 = vsyncpa [#allocation3], 1
    %95 = vsyncpa [#allocation6], 1
    %96 = vsyncpa [#allocation4], 1

</llo_original>
